<compile_context>
chip_gen: v6e
topology: v6e:2x2x1
jax: 0.10.0
libtpu: 0.0.40
codegen_flags: <defaults>
</compile_context>

<pallas_src>
import functools

import jax
import jax.numpy as jnp
from jax.experimental import pallas as pl
from jax.experimental.pallas import tpu as pltpu


def _round_up(x, m):
    return ((x + m - 1) // m) * m


def _pairwise(xr_raw, xc_raw):
    """Pairwise L2 between a row slab (tm, d) and a column slab (nc, d).

    Returns (squared_distances, distances), both (tm, nc) f32.  The Gram runs on the MXU in
    the input's native dtype; row norms are a lane reduction; column norms use a ones-row
    matvec on the MXU so no (n,1)->(1,n) cross-lane relayout is needed.
    """
    dn = (((1,), (1,)), ((), ()))
    gram = jax.lax.dot_general(xr_raw, xc_raw, dn, preferred_element_type=jnp.float32)
    xr = xr_raw.astype(jnp.float32)
    xc = xc_raw.astype(jnp.float32)
    sq_r = jnp.sum(xr * xr, axis=1, keepdims=True)                        # (tm, 1)
    ones_row = jnp.ones((1, xc.shape[1]), jnp.float32)
    sq_c = jax.lax.dot_general(ones_row, xc * xc, dn,
                               preferred_element_type=jnp.float32)        # (1, nc)
    sqd = jnp.maximum(sq_r + sq_c - 2.0 * gram, 0.0)
    return sqd, jnp.sqrt(sqd)


def _rcl_kernel(src_r_ref, src_c_ref, emb_r_ref, emb_c_ref, out_ref, avg_ref, *,
                margin, inv_tau, inv_s, n_true, n_pad, tm):
    """One (row-block i, source s) grid step.

    src_r_ref: (tm, d_pad)    source-s embeddings for this row block
    src_c_ref: (n_pad, d_pad) source-s embeddings for all rows (pair-matrix columns)
    emb_r_ref: (tm, d_pad)    student embeddings for this row block
    emb_c_ref: (n_pad, d_pad) student embeddings for all rows
    out_ref:   (1, 8, 128)    per-row-block partial loss sum (broadcast over the tile)
    avg_ref:   (tm, n_pad)    f32 scratch accumulating teacher distances over s
    """
    s = pl.program_id(1)
    last_s = pl.num_programs(1) - 1

    @pl.when(s == 0)
    def _():
        avg_ref[...] = jnp.zeros_like(avg_ref)

    # Teacher: accumulate this source's pairwise distances for this row block.
    _, dist_s = _pairwise(src_r_ref[...], src_c_ref[...])
    avg_ref[...] += dist_s

    @pl.when(s == last_s)
    def _():
        i = pl.program_id(0)
        avg = avg_ref[...] * inv_s                                        # (tm, n_pad)
        w = jnp.exp(-(avg * avg) * inv_tau)

        sqd, dist = _pairwise(emb_r_ref[...], emb_c_ref[...])

        if n_pad != n_true:   # compile-time: mask padded rows/columns
            col_valid = (jax.lax.broadcasted_iota(jnp.int32, (tm, n_pad), 1)
                         < n_true).astype(jnp.float32)
            row_valid = (jax.lax.broadcasted_iota(jnp.int32, (tm, n_pad), 0) + i * tm
                         < n_true).astype(jnp.float32)
            row_sum = jnp.sum(dist * col_valid, axis=1, keepdims=True)
        else:
            row_sum = jnp.sum(dist, axis=1, keepdims=True)

        mean_d = row_sum * (1.0 / n_true)
        inv_m = pl.reciprocal(mean_d, approx=True)                        # EUP slot, ~free
        safe = mean_d > 0.0
        nd = jnp.where(safe, dist * inv_m, 0.0)
        nsd = jnp.where(safe, sqd * (inv_m * inv_m), 0.0)

        hinge = jnp.maximum(margin - nd, 0.0)
        # Diagonal terms vanish analytically: dist_ii = sqd_ii = 0 and avg_ii = 0 => w_ii = 1,
        # so both loss terms are 0 there and no explicit (1 - eye) mask is required.
        losses = w * nsd + (1.0 - w) * (hinge * hinge)
        if n_pad != n_true:
            losses = losses * (col_valid * row_valid)

        out_ref[...] = jnp.full(out_ref.shape, jnp.sum(losses), dtype=out_ref.dtype)


def relaxed_contrastive_loss(source_embeddings, embeddings, *, margin=1.0, tau=0.5):
    """source_embeddings: (n, S, d), embeddings: (n, d) -> scalar f32 loss."""
    n, S, d = source_embeddings.shape
    assert embeddings.shape == (n, d)

    # Hardware-aligned padding: d to the 128-lane width, n to the 8-sublane width.
    d_pad = _round_up(d, 128)
    n_pad = _round_up(n, 8)
    # Row-block tile: 256 matches the v6e/v7x MXU tile; fall back to smaller divisors.
    tm = next(t for t in (256, 128, 64, 32, 16, 8) if n_pad % t == 0)
    nb = n_pad // tm

    src = source_embeddings
    emb = embeddings
    if d_pad != d:   # zero-padding d does not change any distance
        src = jnp.pad(src, ((0, 0), (0, 0), (0, d_pad - d)))
        emb = jnp.pad(emb, ((0, 0), (0, d_pad - d)))
    if n_pad != n:   # padded rows/columns are masked out inside the kernel
        src = jnp.pad(src, ((0, n_pad - n), (0, 0), (0, 0)))
        emb = jnp.pad(emb, ((0, n_pad - n), (0, 0)))
    # (n_pad, S, d_pad) -> (n_pad, S*d_pad): row-major reshape, no data movement; source s
    # lives at column offset s*d_pad and is addressed by the BlockSpec index_map
    # (no wrapper-side transpose / extra HBM pass).
    src2d = src.reshape(n_pad, S * d_pad)

    kernel = functools.partial(
        _rcl_kernel,
        margin=float(margin), inv_tau=1.0 / float(tau), inv_s=1.0 / float(S),
        n_true=n, n_pad=n_pad, tm=tm)

    grid_spec = pltpu.PrefetchScalarGridSpec(
        num_scalar_prefetch=0,
        grid=(nb, S),                          # rows: parallel; sources: in-kernel reduction
        in_specs=[
            pl.BlockSpec((tm, d_pad), lambda i, s: (i, s)),      # src rows, source s
            pl.BlockSpec((n_pad, d_pad), lambda i, s: (0, s)),   # src cols, source s
            pl.BlockSpec((tm, d_pad), lambda i, s: (i, 0)),      # emb rows
            pl.BlockSpec((n_pad, d_pad), lambda i, s: (0, 0)),   # emb cols (fetched once)
        ],
        out_specs=pl.BlockSpec((1, 8, 128), lambda i, s: (i, 0, 0)),
        scratch_shapes=[pltpu.VMEM((tm, n_pad), jnp.float32)],
    )

    itemsize = jnp.dtype(emb.dtype).itemsize
    est_vmem = (2 * 2 * (tm + n_pad) * d_pad * itemsize   # double-buffered input slabs
                + 10 * tm * n_pad * 4                     # scratch + live (tm, n_pad) temps
                + 2 * 8 * 128 * 4)                        # output block
    compiler_kwargs = dict(dimension_semantics=("parallel", "arbitrary"))
    if est_vmem > (12 << 20):
        # Default scoped-VMEM limit (16 MiB v5e / 32 MiB v6e,v7x) trips long before physical
        # VMEM; raise it for large n, capped safely below v7x's 64 MiB physical VMEM.
        compiler_kwargs["vmem_limit_bytes"] = int(min(est_vmem * 3 // 2, 56 << 20))

    partials = pl.pallas_call(
        kernel,
        out_shape=jax.ShapeDtypeStruct((nb, 8, 128), jnp.float32),
        grid_spec=grid_spec,
        compiler_params=pltpu.CompilerParams(**compiler_kwargs),
    )(src2d, src2d, emb, emb)

    return jnp.sum(partials[:, 0, 0]) / float(n * (n - 1))


def _reference_loss(source_embeddings, embeddings, margin, tau):
    """Pure-JAX reference of the same semantics (sanity check)."""
    n, S, _ = source_embeddings.shape

    def pdist(x):
        sq = jnp.sum(x * x, axis=-1)
        g = x @ x.T
        d2 = jnp.maximum(sq[:, None] + sq[None, :] - 2.0 * g, 0.0)
        return d2, jnp.sqrt(d2)

    dists = jnp.stack([pdist(source_embeddings[:, s])[1] for s in range(S)], 0)
    avg = jnp.mean(dists, axis=0)
    w = jnp.exp(-(avg ** 2) / tau)
    w_adj = w * (1.0 - jnp.eye(n))
    sqd, dist = pdist(embeddings)
    md = jnp.mean(dist, axis=1, keepdims=True)
    nd = jnp.where(md != 0.0, dist / md, 0.0)
    nsd = jnp.where(md != 0.0, sqd / (md * md), 0.0)
    losses = w_adj * nsd + (1.0 - w) * jnp.maximum(margin - nd, 0.0) ** 2
    return jnp.sum(losses) / (n * (n - 1))


if __name__ == "__main__":
    key = jax.random.PRNGKey(0)
    k1, k2 = jax.random.split(key)
    n, S, d = 8, 4, 32
    margin, tau = 1.0, 0.5

    source_embeddings = jax.random.normal(k1, (n, S, d), jnp.float32)
    embeddings = jax.random.normal(k2, (n, d), jnp.float32)

    loss = relaxed_contrastive_loss(source_embeddings, embeddings, margin=margin, tau=tau)
    loss = jax.block_until_ready(loss)

    ref = _reference_loss(source_embeddings, embeddings, margin, tau)
    # Tolerance accounts for the approximate EUP reciprocal used for the mean-normalization.
    assert abs(float(loss) - float(ref)) < 1e-2 * max(1.0, abs(float(ref))), (
        float(loss), float(ref))

    print("KERNEL_OK")
</pallas_src>

<mosaic_0001>
module attributes {stable_mosaic.version = 11 : i64} {
  func.func @_rcl_kernel(%arg0: i32, %arg1: i32, %arg2: memref<8x128xf32, #tpu.memory_space<vmem>>, %arg3: memref<8x128xf32, #tpu.memory_space<vmem>>, %arg4: memref<8x128xf32, #tpu.memory_space<vmem>>, %arg5: memref<8x128xf32, #tpu.memory_space<vmem>>, %arg6: memref<1x8x128xf32, #tpu.memory_space<vmem>>, %arg7: memref<8x8xf32, #tpu.memory_space<vmem>>) attributes {dimension_semantics = [#tpu.dimension_semantics<parallel>, #tpu.dimension_semantics<arbitrary>], iteration_bounds = array<i64: 1, 4>, scalar_prefetch = 0 : i64, scratch_operands = 1 : i64, tpu.core_type = #tpu.core_type<tc>, window_params = [{transform_indices = @transform_0, window_bounds = array<i64: 8, 128>}, {transform_indices = @transform_1, window_bounds = array<i64: 8, 128>}, {transform_indices = @transform_2, window_bounds = array<i64: 8, 128>}, {pipeline_mode = #tpu.pipeline_mode<synchronous>, transform_indices = @transform_3, window_bounds = array<i64: 8, 128>}, {transform_indices = @transform_4, window_bounds = array<i64: 1, 8, 128>}]} {
    %c0_i32 = arith.constant 0 : i32
    %0 = arith.cmpi eq, %arg1, %c0_i32 : i32
    %1 = arith.extui %0 : i1 to i32
    %c0_i32_0 = arith.constant 0 : i32
    %2 = arith.cmpi ne, %1, %c0_i32_0 : i32
    scf.if %2 {
      %cst_14 = arith.constant 0.000000e+00 : f32
      %27 = vector.broadcast %cst_14 : f32 to vector<8x8xf32>
      %c0_15 = arith.constant 0 : index
      %c0_16 = arith.constant 0 : index
      %28 = vector.load %arg7[%c0_15, %c0_16] : memref<8x8xf32, #tpu.memory_space<vmem>>, vector<8x8xf32>
      tpu.vector_store %arg7[%c0_15, %c0_16], %27 {strides = array<i32>} : memref<8x8xf32, #tpu.memory_space<vmem>>, vector<8x8xf32>,
    } else {
    }
    %c0 = arith.constant 0 : index
    %c0_1 = arith.constant 0 : index
    %3 = vector.load %arg2[%c0, %c0_1] : memref<8x128xf32, #tpu.memory_space<vmem>>, vector<8x128xf32>
    %c0_2 = arith.constant 0 : index
    %c0_3 = arith.constant 0 : index
    %4 = vector.load %arg3[%c0_2, %c0_3] : memref<8x128xf32, #tpu.memory_space<vmem>>, vector<8x128xf32>
    %cst = arith.constant dense<0.000000e+00> : vector<8x8xf32>
    %5 = tpu.matmul %3, %4, %cst {dimension_numbers = #tpu.dot_dimension_numbers<[1], [1], [0], [0], [0, 0, 1, 0], [], []>} : vector<8x128xf32>, vector<8x128xf32>, vector<8x8xf32> -> vector<8x8xf32>
    %6 = arith.mulf %3, %3 : vector<8x128xf32>
    %cst_4 = arith.constant dense<0.000000e+00> : vector<8xf32>
    %7 = vector.multi_reduction <add>, %6, %cst_4 [1] : vector<8x128xf32> to vector<8xf32>
    %8 = vector.shape_cast %7 : vector<8xf32> to vector<8x1xf32>
    %cst_5 = arith.constant 1.000000e+00 : f32
    %9 = vector.broadcast %cst_5 : f32 to vector<1x128xf32>
    %10 = arith.mulf %4, %4 : vector<8x128xf32>
    %cst_6 = arith.constant dense<0.000000e+00> : vector<1x8xf32>
    %11 = tpu.matmul %9, %10, %cst_6 {dimension_numbers = #tpu.dot_dimension_numbers<[1], [1], [0], [0], [0, 0, 1, 0], [], []>} : vector<1x128xf32>, vector<8x128xf32>, vector<1x8xf32> -> vector<1x8xf32>
    %12 = vector.broadcast %8 : vector<8x1xf32> to vector<8x8xf32>
    %13 = vector.broadcast %11 : vector<1x8xf32> to vector<8x8xf32>
    %14 = arith.addf %12, %13 : vector<8x8xf32>
    %cst_7 = arith.constant 2.000000e+00 : f32
    %15 = vector.broadcast %cst_7 : f32 to vector<8x8xf32>
    %16 = arith.mulf %15, %5 : vector<8x8xf32>
    %17 = arith.subf %14, %16 : vector<8x8xf32>
    %cst_8 = arith.constant 0.000000e+00 : f32
    %18 = vector.broadcast %cst_8 : f32 to vector<8x8xf32>
    %19 = arith.maximumf %17, %18 : vector<8x8xf32>
    %20 = math.sqrt %19 : vector<8x8xf32>
    %c0_9 = arith.constant 0 : index
    %c0_10 = arith.constant 0 : index
    %21 = vector.load %arg7[%c0_9, %c0_10] : memref<8x8xf32, #tpu.memory_space<vmem>>, vector<8x8xf32>
    %22 = arith.addf %21, %20 : vector<8x8xf32>
    %c0_11 = arith.constant 0 : index
    %c0_12 = arith.constant 0 : index
    %23 = vector.load %arg7[%c0_11, %c0_12] : memref<8x8xf32, #tpu.memory_space<vmem>>, vector<8x8xf32>
    tpu.vector_store %arg7[%c0_11, %c0_12], %22 {strides = array<i32>} : memref<8x8xf32, #tpu.memory_space<vmem>>, vector<8x8xf32>,
    %c3_i32 = arith.constant 3 : i32
    %24 = arith.cmpi eq, %arg1, %c3_i32 : i32
    %25 = arith.extui %24 : i1 to i32
    %c0_i32_13 = arith.constant 0 : i32
    %26 = arith.cmpi ne, %25, %c0_i32_13 : i32
    scf.if %26 {
      %c0_14 = arith.constant 0 : index
      %c0_15 = arith.constant 0 : index
      %27 = vector.load %arg7[%c0_14, %c0_15] : memref<8x8xf32, #tpu.memory_space<vmem>>, vector<8x8xf32>
      %cst_16 = arith.constant 2.500000e-01 : f32
      %28 = vector.broadcast %cst_16 : f32 to vector<8x8xf32>
      %29 = arith.mulf %27, %28 : vector<8x8xf32>
      %30 = arith.mulf %29, %29 : vector<8x8xf32>
      %cst_17 = arith.constant 0.000000e+00 : f32
      %31 = vector.broadcast %cst_17 : f32 to vector<8x8xf32>
      %32 = arith.subf %31, %30 : vector<8x8xf32>
      %cst_18 = arith.constant 2.000000e+00 : f32
      %33 = vector.broadcast %cst_18 : f32 to vector<8x8xf32>
      %34 = arith.mulf %32, %33 : vector<8x8xf32>
      %35 = math.exp %34 : vector<8x8xf32>
      %c0_19 = arith.constant 0 : index
      %c0_20 = arith.constant 0 : index
      %36 = vector.load %arg4[%c0_19, %c0_20] : memref<8x128xf32, #tpu.memory_space<vmem>>, vector<8x128xf32>
      %c0_21 = arith.constant 0 : index
      %c0_22 = arith.constant 0 : index
      %37 = vector.load %arg5[%c0_21, %c0_22] : memref<8x128xf32, #tpu.memory_space<vmem>>, vector<8x128xf32>
      %cst_23 = arith.constant dense<0.000000e+00> : vector<8x8xf32>
      %38 = tpu.matmul %36, %37, %cst_23 {dimension_numbers = #tpu.dot_dimension_numbers<[1], [1], [0], [0], [0, 0, 1, 0], [], []>} : vector<8x128xf32>, vector<8x128xf32>, vector<8x8xf32> -> vector<8x8xf32>
      %39 = arith.mulf %36, %36 : vector<8x128xf32>
      %cst_24 = arith.constant dense<0.000000e+00> : vector<8xf32>
      %40 = vector.multi_reduction <add>, %39, %cst_24 [1] : vector<8x128xf32> to vector<8xf32>
      %41 = vector.shape_cast %40 : vector<8xf32> to vector<8x1xf32>
      %cst_25 = arith.constant 1.000000e+00 : f32
      %42 = vector.broadcast %cst_25 : f32 to vector<1x128xf32>
      %43 = arith.mulf %37, %37 : vector<8x128xf32>
      %cst_26 = arith.constant dense<0.000000e+00> : vector<1x8xf32>
      %44 = tpu.matmul %42, %43, %cst_26 {dimension_numbers = #tpu.dot_dimension_numbers<[1], [1], [0], [0], [0, 0, 1, 0], [], []>} : vector<1x128xf32>, vector<8x128xf32>, vector<1x8xf32> -> vector<1x8xf32>
      %45 = vector.broadcast %41 : vector<8x1xf32> to vector<8x8xf32>
      %46 = vector.broadcast %44 : vector<1x8xf32> to vector<8x8xf32>
      %47 = arith.addf %45, %46 : vector<8x8xf32>
      %cst_27 = arith.constant 2.000000e+00 : f32
      %48 = vector.broadcast %cst_27 : f32 to vector<8x8xf32>
      %49 = arith.mulf %48, %38 : vector<8x8xf32>
      %50 = arith.subf %47, %49 : vector<8x8xf32>
      %cst_28 = arith.constant 0.000000e+00 : f32
      %51 = vector.broadcast %cst_28 : f32 to vector<8x8xf32>
      %52 = arith.maximumf %50, %51 : vector<8x8xf32>
      %53 = math.sqrt %52 : vector<8x8xf32>
      %cst_29 = arith.constant dense<0.000000e+00> : vector<8xf32>
      %54 = vector.multi_reduction <add>, %53, %cst_29 [1] : vector<8x8xf32> to vector<8xf32>
      %55 = vector.shape_cast %54 : vector<8xf32> to vector<8x1xf32>
      %cst_30 = arith.constant 1.250000e-01 : f32
      %56 = vector.broadcast %cst_30 : f32 to vector<8x1xf32>
      %57 = arith.mulf %55, %56 : vector<8x1xf32>
      %58 = tpu.reciprocal %57 {approx = true} : vector<8x1xf32> -> vector<8x1xf32>
      %cst_31 = arith.constant 0.000000e+00 : f32
      %59 = vector.broadcast %cst_31 : f32 to vector<8x1xf32>
      %60 = arith.cmpf ogt, %57, %59 : vector<8x1xf32>
      %61 = vector.broadcast %58 : vector<8x1xf32> to vector<8x8xf32>
      %62 = arith.mulf %53, %61 : vector<8x8xf32>
      %cst_32 = arith.constant 0.000000e+00 : f32
      %63 = vector.shape_cast %60 : vector<8x1xi1> to vector<8x1xi1>
      %64 = vector.broadcast %63 : vector<8x1xi1> to vector<8x8xi1>
      %65 = vector.broadcast %cst_32 : f32 to vector<8x8xf32>
      %66 = arith.select %64, %62, %65 : vector<8x8xi1>, vector<8x8xf32>
      %67 = arith.mulf %58, %58 : vector<8x1xf32>
      %68 = vector.broadcast %67 : vector<8x1xf32> to vector<8x8xf32>
      %69 = arith.mulf %52, %68 : vector<8x8xf32>
      %cst_33 = arith.constant 0.000000e+00 : f32
      %70 = vector.shape_cast %60 : vector<8x1xi1> to vector<8x1xi1>
      %71 = vector.broadcast %70 : vector<8x1xi1> to vector<8x8xi1>
      %72 = vector.broadcast %cst_33 : f32 to vector<8x8xf32>
      %73 = arith.select %71, %69, %72 : vector<8x8xi1>, vector<8x8xf32>
      %cst_34 = arith.constant 1.000000e+00 : f32
      %74 = vector.broadcast %cst_34 : f32 to vector<8x8xf32>
      %75 = arith.subf %74, %66 : vector<8x8xf32>
      %cst_35 = arith.constant 0.000000e+00 : f32
      %76 = vector.broadcast %cst_35 : f32 to vector<8x8xf32>
      %77 = arith.maximumf %75, %76 : vector<8x8xf32>
      %78 = arith.mulf %35, %73 : vector<8x8xf32>
      %cst_36 = arith.constant 1.000000e+00 : f32
      %79 = vector.broadcast %cst_36 : f32 to vector<8x8xf32>
      %80 = arith.subf %79, %35 : vector<8x8xf32>
      %81 = arith.mulf %77, %77 : vector<8x8xf32>
      %82 = arith.mulf %80, %81 : vector<8x8xf32>
      %83 = arith.addf %78, %82 : vector<8x8xf32>
      %84 = vector.shape_cast %83 : vector<8x8xf32> to vector<1x8x8xf32>
      %cst_37 = arith.constant dense<0.000000e+00> : vector<1xf32>
      %85 = vector.multi_reduction <add>, %84, %cst_37 [1, 2] : vector<1x8x8xf32> to vector<1xf32>
      %86 = vector.shape_cast %85 : vector<1xf32> to vector<1x1x1xf32>
      %87 = vector.extract %86[0, 0, 0] : f32 from vector<1x1x1xf32>
      %88 = vector.broadcast %87 : f32 to vector<1x8x128xf32>
      %c0_38 = arith.constant 0 : index
      %c0_39 = arith.constant 0 : index
      %c0_40 = arith.constant 0 : index
      %89 = vector.load %arg6[%c0_38, %c0_39, %c0_40] : memref<1x8x128xf32, #tpu.memory_space<vmem>>, vector<1x8x128xf32>
      tpu.vector_store %arg6[%c0_38, %c0_39, %c0_40], %88 {strides = array<i32>} : memref<1x8x128xf32, #tpu.memory_space<vmem>>, vector<1x8x128xf32>,
    } else {
    }
    return
  }
  func.func @transform_0(%arg0: i32, %arg1: i32) -> (i32, i32) {
    %c0_i32 = arith.constant 0 : i32
    return %arg0, %arg1 : i32, i32
  }
  func.func @transform_1(%arg0: i32, %arg1: i32) -> (i32, i32) {
    %c0_i32 = arith.constant 0 : i32
    %c0_i32_0 = arith.constant 0 : i32
    return %c0_i32, %arg1 : i32, i32
  }
  func.func @transform_2(%arg0: i32, %arg1: i32) -> (i32, i32) {
    %c0_i32 = arith.constant 0 : i32
    %c0_i32_0 = arith.constant 0 : i32
    return %arg0, %c0_i32 : i32, i32
  }
  func.func @transform_3(%arg0: i32, %arg1: i32) -> (i32, i32) {
    %c0_i32 = arith.constant 0 : i32
    %c0_i32_0 = arith.constant 0 : i32
    %c0_i32_1 = arith.constant 0 : i32
    return %c0_i32, %c0_i32_0 : i32, i32
  }
  func.func @transform_4(%arg0: i32, %arg1: i32) -> (i32, i32, i32) {
    %c0_i32 = arith.constant 0 : i32
    %c0_i32_0 = arith.constant 0 : i32
    %c0_i32_1 = arith.constant 0 : i32
    return %arg0, %c0_i32, %c0_i32_0 : i32, i32, i32
  }
}

</mosaic_0001>

<llo_original>
// kernel: tpu_custom_call.1
$region0: #{tpu_custom_call.1}
  #allocation0 [shape = 'u32[]', space=smem, size = 0x4, offset = 0x4, fixed_abs, tag = 'smem constant byte address 0x4 - core index']
  #allocation1 [shape = 'u32[144,128]{1,0:T(1,128)}', space=vmem, size = 0x12000, scoped, tag = 'internal scratch']
  #allocation2 [shape = 'f32[8,8]{1,0:T(8,128)}', space=vmem, size = 0x1000, scoped, tag = 'scratch operand']
  %s0 = inlined_call_operand.hbm [shape: f32[8,512], index: 0, kind: input, shape index: {}]
  %s1 = inlined_call_operand.hbm [shape: f32[8,512], index: 1, kind: input, shape index: {}]
  %s2 = inlined_call_operand.hbm [shape: f32[8,128], index: 2, kind: input, shape index: {}]
  %s3 = inlined_call_operand.hbm [shape: f32[8,128], index: 3, kind: input, shape index: {}]
  %s4 = inlined_call_operand.hbm [shape: f32[1,8,128], index: 4, kind: output, shape index: {}]
  %s5 = sld [smem:[#allocation0]]
  $region73: #{tpu_custom_call.1} parent=0
    _
  %s7 = ssub.s32 1, %s5
  %s8 = scalar_select 0, %s7, %s5
  $region1: #{tpu_custom_call.1} parent=0
    #allocation3 [shape = 'u8[8192]{0}', space=vmem, size = 0x2000, scoped, tag = 'input window, operand 0']
    #allocation4 [shape = 's32[2]{0}', space=sflag, size = 0x8, scoped, tag = 'scoped memory for tpu_custom_call.1']
    #allocation5 [shape = 's32[2]{0}', space=sflag, size = 0x8, scoped, tag = 'scoped memory for tpu_custom_call.1']
    #allocation6 [shape = 'u8[8192]{0}', space=vmem, size = 0x2000, scoped, tag = 'input window, operand 1']
    #allocation7 [shape = 's32[2]{0}', space=sflag, size = 0x8, scoped, tag = 'scoped memory for tpu_custom_call.1']
    #allocation8 [shape = 'u8[4096]{0}', space=vmem, size = 0x1000, scoped, tag = 'input window, operand 2, single buffered']
    #allocation9 [shape = 'u8[4096]{0}', space=vmem, size = 0x1000, scoped, tag = 'input window, operand 3, single buffered']
    #allocation10 [shape = 's32[1]{0}', space=sflag, size = 0x4, scoped, tag = 'scoped memory for tpu_custom_call.1']
    #allocation11 [shape = 'u8[4096]{0}', space=vmem, size = 0x1000, scoped, tag = 'output window, operand 0, single buffered']
    %9 = vsyncpa [#allocation4], 0
    %s10 = scalar_lea.sflag [#allocation4], 1
    %11 = vsyncpa %s10, 0
    %12 = vsyncpa [#allocation7], 0
    %s13 = scalar_lea.sflag [#allocation7], 1
    %14 = vsyncpa %s13, 0
    %15 = vsyncpa [#allocation10], 0
    %16 = vsyncpa [#allocation5], 0
    loop: start=0, step=1, limit=6
    $region2: #{tpu_custom_call.1} parent=1 // loop_pre_header
      _
    $region3: #{tpu_custom_call.1} parent=1 // loop_header
      %s18 = sphi 0, %s22
      %p19 = scmp.ge.s32.totalorder %s18, 6
      %s25 = sphi 0, %s37
      %s26 = sphi 0, %s33
      %s27 = sphi 0, %s25
      %s28 = sphi 0, %s26
      %s29 = sphi 0, %s27
      %s30 = sphi 0, %s28
      %s42 = sphi 0, %s44
      %s45 = sphi 0, %s42
      %s46 = sphi 0, %s45
      %s62 = sphi 0, %s46
      %s68 = sphi 0, %s70
      %s71 = sphi 0, %s68
      %s72 = sphi 0, %s71
      %s88 = sphi 0, %s72
      %s94 = sphi 0, %s96
      %s97 = sphi 0, %s94
      %s98 = sphi 0, %s97
      %s114 = sphi 0, %s98
      %s118 = sphi 0, %s118
      %s120 = sphi 0, %s118
      %s121 = sphi 0, %s120
      %s135 = sphi 0, %s121
      %s141 = sphi 0, %s143
      %s144 = sphi 0, %s141
      %s145 = sphi 0, %s144
      %s161 = sphi 0, %s145
    $region4: #{tpu_custom_call.1} parent=1 // loop_header_branch
      %21 = sbr.rel (%p19) target = $region8
    $region5: #{tpu_custom_call.1} parent=1 // loop_body
      %s23 = ssub.s32 %s18, 1
      %s24 = ssub.s32 %s18, 2
      %s31 = sadd.s32 1, %s26
      %p32 = scmp.ge.s32.totalorder %s31, 4
      %s33 = scalar_select %p32, 0, %s31
      %s34 = sadd.s32 1, %s25
      %s35 = scalar_select %p32, %s34, %s25
      %p36 = scmp.ge.s32.totalorder %s35, 1
      %s37 = scalar_select %p36, 0, %s35
      %s38 = ssub.s32 %s25, %s37
      %s39 = ssub.s32 %s26, %s33
      %s40 = sor.u32 %s38, %s39
      %p41 = scmp.eq.s32.totalorder %s40, 0
      %s43 = sadd.s32 %s42, 1
      %s44 = scalar_select %p41, %s42, %s43
      %p47 = pneg %p41
      %p48 = scmp.eq.s32.totalorder %s18, 3
      %p49 = por %p47, %p48
      %p50 = scmp.ne.s32.totalorder %s42, %s45
      %p51 = scmp.eq.s32.totalorder %s18, 0
      %p52 = por %p50, %p51
      %p53 = scmp.ne.s32.totalorder %s42, %s45
      %p54 = scmp.eq.s32.totalorder %s23, 3
      %p55 = por %p53, %p54
      %p56 = scmp.ne.s32.totalorder %s45, %s46
      %p57 = scmp.eq.s32.totalorder %s23, 0
      %p58 = por %p56, %p57
      %p59 = scmp.ne.s32.totalorder %s45, %s46
      %p60 = scmp.eq.s32.totalorder %s24, 3
      %p61 = por %p59, %p60
      %p63 = scmp.ne.s32.totalorder %s46, %s62
      %p64 = scmp.eq.s32.totalorder %s24, 0
      %p65 = por %p63, %p64
      %s66 = ssub.s32 %s26, %s33
      %p67 = scmp.eq.s32.totalorder %s66, 0
      %s69 = sadd.s32 %s68, 1
      %s70 = scalar_select %p67, %s68, %s69
      %p73 = pneg %p67
      %p74 = scmp.eq.s32.totalorder %s18, 3
      %p75 = por %p73, %p74
      %p76 = scmp.ne.s32.totalorder %s68, %s71
      %p77 = scmp.eq.s32.totalorder %s18, 0
      %p78 = por %p76, %p77
      %p79 = scmp.ne.s32.totalorder %s68, %s71
      %p80 = scmp.eq.s32.totalorder %s23, 3
      %p81 = por %p79, %p80
      %p82 = scmp.ne.s32.totalorder %s71, %s72
      %p83 = scmp.eq.s32.totalorder %s23, 0
      %p84 = por %p82, %p83
      %p85 = scmp.ne.s32.totalorder %s71, %s72
      %p86 = scmp.eq.s32.totalorder %s24, 3
      %p87 = por %p85, %p86
      %p89 = scmp.ne.s32.totalorder %s72, %s88
      %p90 = scmp.eq.s32.totalorder %s24, 0
      %p91 = por %p89, %p90
      %s92 = ssub.s32 %s25, %s37
      %p93 = scmp.eq.s32.totalorder %s92, 0
      %s95 = sadd.s32 %s94, 1
      %s96 = scalar_select %p93, %s94, %s95
      %p99 = pneg %p93
      %p100 = scmp.eq.s32.totalorder %s18, 3
      %p101 = por %p99, %p100
      %p102 = scmp.ne.s32.totalorder %s94, %s97
      %p103 = scmp.eq.s32.totalorder %s18, 0
      %p104 = por %p102, %p103
      %p105 = scmp.ne.s32.totalorder %s94, %s97
      %p106 = scmp.eq.s32.totalorder %s23, 3
      %p107 = por %p105, %p106
      %p108 = scmp.ne.s32.totalorder %s97, %s98
      %p109 = scmp.eq.s32.totalorder %s23, 0
      %p110 = por %p108, %p109
      %p111 = scmp.ne.s32.totalorder %s97, %s98
      %p112 = scmp.eq.s32.totalorder %s24, 3
      %p113 = por %p111, %p112
      %p115 = scmp.ne.s32.totalorder %s98, %s114
      %p116 = scmp.eq.s32.totalorder %s24, 0
      %p117 = por %p115, %p116
      %s119 = sadd.s32 %s118, 1
      %p122 = scmp.eq.s32.totalorder %s18, 3
      %p123 = scmp.ne.s32.totalorder %s118, %s120
      %p124 = scmp.eq.s32.totalorder %s18, 0
      %p125 = por %p123, %p124
      %p126 = scmp.ne.s32.totalorder %s118, %s120
      %p127 = scmp.eq.s32.totalorder %s23, 3
      %p128 = por %p126, %p127
      %p129 = scmp.ne.s32.totalorder %s120, %s121
      %p130 = scmp.eq.s32.totalorder %s23, 0
      %p131 = por %p129, %p130
      %p132 = scmp.ne.s32.totalorder %s120, %s121
      %p133 = scmp.eq.s32.totalorder %s24, 3
      %p134 = por %p132, %p133
      %p136 = scmp.ne.s32.totalorder %s121, %s135
      %p137 = scmp.eq.s32.totalorder %s24, 0
      %p138 = por %p136, %p137
      %s139 = ssub.s32 %s25, %s37
      %p140 = scmp.eq.s32.totalorder %s139, 0
      %s142 = sadd.s32 %s141, 1
      %s143 = scalar_select %p140, %s141, %s142
      %p146 = pneg %p140
      %p147 = scmp.eq.s32.totalorder %s18, 3
      %p148 = por %p146, %p147
      %p149 = scmp.ne.s32.totalorder %s141, %s144
      %p150 = scmp.eq.s32.totalorder %s18, 0
      %p151 = por %p149, %p150
      %p152 = scmp.ne.s32.totalorder %s141, %s144
      %p153 = scmp.eq.s32.totalorder %s23, 3
      %p154 = por %p152, %p153
      %p155 = scmp.ne.s32.totalorder %s144, %s145
      %p156 = scmp.eq.s32.totalorder %s23, 0
      %p157 = por %p155, %p156
      %p158 = scmp.ne.s32.totalorder %s144, %s145
      %p159 = scmp.eq.s32.totalorder %s24, 3
      %p160 = por %p158, %p159
      %p162 = scmp.ne.s32.totalorder %s145, %s161
      %p163 = scmp.eq.s32.totalorder %s24, 0
      %p164 = por %p162, %p163
      %p165 = scmp.le.s32.totalorder 1, %s18
      %p166 = scmp.lt.s32.totalorder %s18, 5
      %p167 = pnand %p165, %p166
      %p168 = pneg %p167
      // Predicated region
      $region9: #{tpu_custom_call.1} parent=5 // pred_check
        _
      $region10: #{tpu_custom_call.1} parent=5 // pred_check_branch
        %170 = sbr.rel (%p167) target = $region12
      $region11: #{tpu_custom_call.1} parent=5 // pred_region
        %s171 = ssub.s32 %s18, 1
        // Predicated region
        $region13: #{tpu_custom_call.1} parent=11 // pred_check
          %p172 = pneg %p110
        $region14: #{tpu_custom_call.1} parent=11 // pred_check_branch
          %174 = sbr.rel (%p172) target = $region16
        $region15: #{tpu_custom_call.1} parent=11 // pred_region
          %s176 = ssub.s32 128, 128
          %177 = vsyncadd [#allocation7], %s176
          %s178 = smul.addr %s27, 128
          %s179 = scalar_lea.hbm %s2, %s178
          %s181 = sshll.u32 [#allocation8], 4
          %s182 = int_to_ptr.vmem [resolvable:$true] %s181
          %184 = dma.hbm_to_vmem [thread:$0]  %s179, 128, %s182, [#allocation7]
        $region16: #{tpu_custom_call.1} parent=11 // pred_fallthru
          _
        // Predicated region
        $region17: #{tpu_custom_call.1} parent=11 // pred_check
          %p185 = pneg %p131
        $region18: #{tpu_custom_call.1} parent=11 // pred_check_branch
          %187 = sbr.rel (%p185) target = $region20
        $region19: #{tpu_custom_call.1} parent=11 // pred_region
          %s189 = ssub.s32 128, 128
          %190 = vsyncadd [#allocation10], %s189
          %s192 = sshll.u32 [#allocation9], 4
          %s193 = int_to_ptr.vmem [resolvable:$true] %s192
          %195 = dma.hbm_to_vmem [thread:$0]  %s3, 128, %s193, [#allocation10]
        $region20: #{tpu_custom_call.1} parent=11 // pred_fallthru
          _
      $region12: #{tpu_custom_call.1} parent=5 // pred_fallthru
        _
      %p196 = scmp.lt.s32.totalorder %s18, 4
      // Predicated region
      $region21: #{tpu_custom_call.1} parent=5 // pred_check
        %p197 = pneg %p196
      $region22: #{tpu_custom_call.1} parent=5 // pred_check_branch
        %199 = sbr.rel (%p197) target = $region24
      $region23: #{tpu_custom_call.1} parent=5 // pred_region
        // Predicated region
        $region25: #{tpu_custom_call.1} parent=23 // pred_check
          %p200 = pneg %p52
        $region26: #{tpu_custom_call.1} parent=23 // pred_check_branch
          %202 = sbr.rel (%p200) target = $region28
        $region27: #{tpu_custom_call.1} parent=23 // pred_region
          %s203 = sand.u32 %s42, 1
          %s204 = scalar_lea.sflag [#allocation4], %s203
          %s205 = sand.u32 %s42, 1
          %s206 = smul.addr %s205, 8
          %s207 = scalar_lea.vmem [#allocation3], %s206
          %s209 = ssub.s32 128, 128
          %210 = vsyncadd %s204, %s209
          %s211 = smul.addr %s25, 4
          %s212 = sadd.s32 %s26, %s211
          %s213 = smul.addr %s212, 128
          %s214 = scalar_lea.hbm %s0, %s213
          %s216 = sshll.u32 %s207, 4
          %s217 = int_to_ptr.vmem [resolvable:$true] %s216
          %219 = dma.hbm_to_vmem [thread:$0]  %s214, 128, %s217, %s204
        $region28: #{tpu_custom_call.1} parent=23 // pred_fallthru
          _
        // Predicated region
        $region29: #{tpu_custom_call.1} parent=23 // pred_check
          %p220 = pneg %p78
        $region30: #{tpu_custom_call.1} parent=23 // pred_check_branch
          %222 = sbr.rel (%p220) target = $region32
        $region31: #{tpu_custom_call.1} parent=23 // pred_region
          %s223 = sand.u32 %s18, 1
          %s224 = scalar_lea.sflag [#allocation7], %s223
          %s225 = sand.u32 %s68, 1
          %s226 = smul.addr %s225, 8
          %s227 = scalar_lea.vmem [#allocation6], %s226
          %s229 = ssub.s32 128, 128
          %230 = vsyncadd %s224, %s229
          %s231 = smul.addr %s26, 128
          %s232 = scalar_lea.hbm %s1, %s231
          %s234 = sshll.u32 %s227, 4
          %s235 = int_to_ptr.vmem [resolvable:$true] %s234
          %237 = dma.hbm_to_vmem [thread:$0]  %s232, 128, %s235, %s224
        $region32: #{tpu_custom_call.1} parent=23 // pred_fallthru
          _
      $region24: #{tpu_custom_call.1} parent=5 // pred_fallthru
        _
      %p238 = scmp.le.s32.totalorder 1, %s18
      %p239 = scmp.lt.s32.totalorder %s18, 5
      %p240 = pnand %p238, %p239
      %p241 = pneg %p240
      // Predicated region
      $region33: #{tpu_custom_call.1} parent=5 // pred_check
        _
      $region34: #{tpu_custom_call.1} parent=5 // pred_check_branch
        %243 = sbr.rel (%p240) target = $region36
      $region35: #{tpu_custom_call.1} parent=5 // pred_region
        %s244 = ssub.s32 %s18, 1
        %s245 = sand.u32 %s45, 1
        %s246 = scalar_lea.sflag [#allocation4], %s245
        %s247 = sand.u32 %s45, 1
        %s248 = smul.addr %s247, 8
        %s249 = scalar_lea.vmem [#allocation3], %s248
        // Predicated region
        $region37: #{tpu_custom_call.1} parent=35 // pred_check
          %p250 = pneg %p58
        $region38: #{tpu_custom_call.1} parent=35 // pred_check_branch
          %252 = sbr.rel (%p250) target = $region40
        $region39: #{tpu_custom_call.1} parent=35 // pred_region
          %253 = dma.done %s246, 128
        $region40: #{tpu_custom_call.1} parent=35 // pred_fallthru
          _
        %s254 = sand.u32 %s23, 1
        %s255 = scalar_lea.sflag [#allocation7], %s254
        %s256 = sand.u32 %s71, 1
        %s257 = smul.addr %s256, 8
        %s258 = scalar_lea.vmem [#allocation6], %s257
        // Predicated region
        $region41: #{tpu_custom_call.1} parent=35 // pred_check
          %p259 = pneg %p84
        $region42: #{tpu_custom_call.1} parent=35 // pred_check_branch
          %261 = sbr.rel (%p259) target = $region44
        $region43: #{tpu_custom_call.1} parent=35 // pred_region
          %262 = dma.done %s255, 128
        $region44: #{tpu_custom_call.1} parent=35 // pred_fallthru
          _
        // Predicated region
        $region45: #{tpu_custom_call.1} parent=35 // pred_check
          %p263 = pneg %p110
        $region46: #{tpu_custom_call.1} parent=35 // pred_check_branch
          %265 = sbr.rel (%p263) target = $region48
        $region47: #{tpu_custom_call.1} parent=35 // pred_region
          %266 = dma.done [#allocation7], 128
        $region48: #{tpu_custom_call.1} parent=35 // pred_fallthru
          _
        // Predicated region
        $region49: #{tpu_custom_call.1} parent=35 // pred_check
          %p267 = pneg %p131
        $region50: #{tpu_custom_call.1} parent=35 // pred_check_branch
          %269 = sbr.rel (%p267) target = $region52
        $region51: #{tpu_custom_call.1} parent=35 // pred_region
          %270 = dma.done [#allocation10], 128
        $region52: #{tpu_custom_call.1} parent=35 // pred_fallthru
          _
        %s271 = sand.u32 %s45, 1
        %s272 = scalar_lea.sflag [#allocation4], %s271
        %s273 = sand.u32 %s45, 1
        %s274 = smul.addr %s273, 8
        %s275 = scalar_lea.vmem [#allocation3], %s274
        %p276 = pneg %p58
        %p277 = pneg %p55
        %s278 = sand.u32 %s23, 1
        %s279 = scalar_lea.sflag [#allocation7], %s278
        %s280 = sand.u32 %s71, 1
        %s281 = smul.addr %s280, 8
        %s282 = scalar_lea.vmem [#allocation6], %s281
        %p283 = pneg %p84
        %p284 = pneg %p81
        %p285 = pneg %p110
        %p286 = pneg %p107
        %p287 = pneg %p131
        %p288 = pneg %p128
        %p289 = pneg %p157
        %p290 = pneg %p154
        %p291 = scmp.eq.s32.totalorder %s28, 0
        // Predicated region
        $region53: #{tpu_custom_call.1} parent=35 // pred_check
          %p292 = pneg %p291
        $region54: #{tpu_custom_call.1} parent=35 // pred_check_branch
          %294 = sbr.rel (%p292) target = $region56
        $region55: #{tpu_custom_call.1} parent=35 // pred_region
          %vm295 = vcmask 64512
          %296 = vst.msk [vmem:[#allocation2] sm:$0xff] %vm295, 0.0
        $region56: #{tpu_custom_call.1} parent=35 // pred_fallthru
          _
        %v297 = vld [vmem:[%s249] sm:$0xff]
        %v298 = vld [vmem:[%s258] sm:$0xff]
        %299 = vmatprep.subr.mxu0 0.0
        %300 = vmatpush1.xpose.msra.mxu0 0.0
        %301 = vmatprep.subr.mxu0 0.0
        %302 = vmatpush1.xpose.msra.mxu0 0.0
        %303 = vmatprep.subr.mxu0 0.0
        %304 = vmatpush1.xpose.msra.mxu0 0.0
        %305 = vmatprep.subr.mxu0 0.0
        %306 = vmatpush1.xpose.msra.mxu0 0.0
        %307 = vmatprep.subr.mxu0 0.0
        %308 = vmatpush1.xpose.msra.mxu0 0.0
        %309 = vmatprep.subr.mxu0 0.0
        %310 = vmatpush1.xpose.msra.mxu0 0.0
        %311 = vmatprep.subr.mxu0 0.0
        %312 = vmatpush1.xpose.msra.mxu0 0.0
        %313 = vmatprep.subr.mxu0 0.0
        %314 = vmatpush1.xpose.msra.mxu0 0.0
        %315 = vmatprep.subr.mxu0 0.0
        %316 = vmatpush1.xpose.msra.mxu0 0.0
        %317 = vmatprep.subr.mxu0 0.0
        %318 = vmatpush1.xpose.msra.mxu0 0.0
        %319 = vmatprep.subr.mxu0 0.0
        %320 = vmatpush1.xpose.msra.mxu0 0.0
        %321 = vmatprep.subr.mxu0 0.0
        %322 = vmatpush1.xpose.msra.mxu0 0.0
        %323 = vmatprep.subr.mxu0 0.0
        %324 = vmatpush1.xpose.msra.mxu0 0.0
        %325 = vmatprep.subr.mxu0 0.0
        %326 = vmatpush1.xpose.msra.mxu0 0.0
        %327 = vmatprep.subr.mxu0 0.0
        %328 = vmatpush1.xpose.msra.mxu0 0.0
        %329 = vmatprep.subr.mxu0 0.0
        %330 = vmatpush1.xpose.msra.mxu0 %v298
        %331 = vmatprep.subr.mxu0 0.0
        %332 = vmatpush2.xpose.msra.mxu0 0.0
        %333 = vmatprep.subr.mxu0 0.0
        %334 = vmatpush2.xpose.msra.mxu0 0.0
        %335 = vmatprep.subr.mxu0 0.0
        %336 = vmatpush2.xpose.msra.mxu0 0.0
        %337 = vmatprep.subr.mxu0 0.0
        %338 = vmatpush2.xpose.msra.mxu0 0.0
        %339 = vmatprep.subr.mxu0 0.0
        %340 = vmatpush2.xpose.msra.mxu0 0.0
        %341 = vmatprep.subr.mxu0 0.0
        %342 = vmatpush2.xpose.msra.mxu0 0.0
        %343 = vmatprep.subr.mxu0 0.0
        %344 = vmatpush2.xpose.msra.mxu0 0.0
        %345 = vmatprep.subr.mxu0 0.0
        %346 = vmatpush2.xpose.msra.mxu0 0.0
        %347 = vmatprep.subr.mxu0 0.0
        %348 = vmatpush2.xpose.msra.mxu0 0.0
        %349 = vmatprep.subr.mxu0 0.0
        %350 = vmatpush2.xpose.msra.mxu0 0.0
        %351 = vmatprep.subr.mxu0 0.0
        %352 = vmatpush2.xpose.msra.mxu0 0.0
        %353 = vmatprep.subr.mxu0 0.0
        %354 = vmatpush2.xpose.msra.mxu0 0.0
        %355 = vmatprep.subr.mxu0 0.0
        %356 = vmatpush2.xpose.msra.mxu0 0.0
        %357 = vmatprep.subr.mxu0 0.0
        %358 = vmatpush2.xpose.msra.mxu0 0.0
        %359 = vmatprep.subr.mxu0 0.0
        %360 = vmatpush2.xpose.msra.mxu0 0.0
        %361 = vmatprep.subr.mxu0 0.0
        %362 = vmatpush2.xpose.msra.mxu0 0.0
        %363 = vmatprep.mubr.f32.mxu0 0.0
        %364 = vmatmul.mubr.f32.gmra.mxu0 %v297
        %v365 = vpop.f32.mrf.mxu0
        %v366 = vadd.f32 0.0, %v365
        %v367 = vpop.f32.mrf.mxu0
        %368 = vdwg.mxu0
        %v369 = vmul.f32 %v297, %v297
        %370 = vadd.xlane.f32.xlu0 %v369
        %v371 = vpop.xlane.xlu0 %370
        %v372 = vmul.f32 %v298, %v298
        %373 = vmatprep.subr.mxu0 0.0
        %374 = vmatpush1.xpose.msra.mxu0 0.0
        %375 = vmatprep.subr.mxu0 0.0
        %376 = vmatpush1.xpose.msra.mxu0 0.0
        %377 = vmatprep.subr.mxu0 0.0
        %378 = vmatpush1.xpose.msra.mxu0 0.0
        %379 = vmatprep.subr.mxu0 0.0
        %380 = vmatpush1.xpose.msra.mxu0 0.0
        %381 = vmatprep.subr.mxu0 0.0
        %382 = vmatpush1.xpose.msra.mxu0 0.0
        %383 = vmatprep.subr.mxu0 0.0
        %384 = vmatpush1.xpose.msra.mxu0 0.0
        %385 = vmatprep.subr.mxu0 0.0
        %386 = vmatpush1.xpose.msra.mxu0 0.0
        %387 = vmatprep.subr.mxu0 0.0
        %388 = vmatpush1.xpose.msra.mxu0 0.0
        %389 = vmatprep.subr.mxu0 0.0
        %390 = vmatpush1.xpose.msra.mxu0 0.0
        %391 = vmatprep.subr.mxu0 0.0
        %392 = vmatpush1.xpose.msra.mxu0 0.0
        %393 = vmatprep.subr.mxu0 0.0
        %394 = vmatpush1.xpose.msra.mxu0 0.0
        %395 = vmatprep.subr.mxu0 0.0
        %396 = vmatpush1.xpose.msra.mxu0 0.0
        %397 = vmatprep.subr.mxu0 0.0
        %398 = vmatpush1.xpose.msra.mxu0 0.0
        %399 = vmatprep.subr.mxu0 0.0
        %400 = vmatpush1.xpose.msra.mxu0 0.0
        %401 = vmatprep.subr.mxu0 0.0
        %402 = vmatpush1.xpose.msra.mxu0 0.0
        %403 = vmatprep.subr.mxu0 0.0
        %404 = vmatpush1.xpose.msra.mxu0 %v372
        %405 = vmatprep.subr.mxu0 0.0
        %406 = vmatpush2.xpose.msra.mxu0 0.0
        %407 = vmatprep.subr.mxu0 0.0
        %408 = vmatpush2.xpose.msra.mxu0 0.0
        %409 = vmatprep.subr.mxu0 0.0
        %410 = vmatpush2.xpose.msra.mxu0 0.0
        %411 = vmatprep.subr.mxu0 0.0
        %412 = vmatpush2.xpose.msra.mxu0 0.0
        %413 = vmatprep.subr.mxu0 0.0
        %414 = vmatpush2.xpose.msra.mxu0 0.0
        %415 = vmatprep.subr.mxu0 0.0
        %416 = vmatpush2.xpose.msra.mxu0 0.0
        %417 = vmatprep.subr.mxu0 0.0
        %418 = vmatpush2.xpose.msra.mxu0 0.0
        %419 = vmatprep.subr.mxu0 0.0
        %420 = vmatpush2.xpose.msra.mxu0 0.0
        %421 = vmatprep.subr.mxu0 0.0
        %422 = vmatpush2.xpose.msra.mxu0 0.0
        %423 = vmatprep.subr.mxu0 0.0
        %424 = vmatpush2.xpose.msra.mxu0 0.0
        %425 = vmatprep.subr.mxu0 0.0
        %426 = vmatpush2.xpose.msra.mxu0 0.0
        %427 = vmatprep.subr.mxu0 0.0
        %428 = vmatpush2.xpose.msra.mxu0 0.0
        %429 = vmatprep.subr.mxu0 0.0
        %430 = vmatpush2.xpose.msra.mxu0 0.0
        %431 = vmatprep.subr.mxu0 0.0
        %432 = vmatpush2.xpose.msra.mxu0 0.0
        %433 = vmatprep.subr.mxu0 0.0
        %434 = vmatpush2.xpose.msra.mxu0 0.0
        %435 = vmatprep.subr.mxu0 0.0
        %436 = vmatpush2.xpose.msra.mxu0 0.0
        %437 = vmatprep.mubr.f32.mxu0 0.0
        %438 = vmatmul.mubr.f32.gmra.mxu0 1.0
        %v439 = vpop.f32.mrf.mxu0
        %v440 = vadd.f32 0.0, %v439
        %v441 = vpop.f32.mrf.mxu0
        %442 = vdwg.mxu0
        %v443 = vlaneseq
        %v444 = vshrl.u32 %v443, 7
        %v445 = vsub.s32 0, %v444
        %v446 = vrot.slane %v440, %v445
        %v447 = vadd.f32 %v371, %v446
        %v448 = vmul.f32 %v366, 2.0
        %v449 = vsub.f32 %v447, %v448
        %v450 = vmax.f32 %v449, 0.0
        %v451 = vrsqrt.pop %v450
        %v452 = vmul.f32 %v450, %v451
        %vm453 = vcmp.eq.f32.partialorder %v450, inf
        %v454 = vsel %vm453, %v450, %v452
        %vm455 = vcmp.eq.f32.partialorder %v450, 0.0
        %v456 = vand.u32 %v450, 2147483648
        %v457 = vsel %vm455, %v456, %v454
        %v458 = vld [vmem:[#allocation2] sm:$0xff]
        %v459 = vadd.f32 %v458, %v457
        %vm460 = vcmask 64512
        %461 = vst.msk [vmem:[#allocation2] sm:$0xff] %vm460, %v459
        %p462 = scmp.eq.s32.totalorder %s28, 3
        // Predicated region
        $region57: #{tpu_custom_call.1} parent=35 // pred_check
          %p463 = pneg %p462
        $region58: #{tpu_custom_call.1} parent=35 // pred_check_branch
          %465 = sbr.rel (%p463) target = $region60
        $region59: #{tpu_custom_call.1} parent=35 // pred_region
          %v466 = vld [vmem:[#allocation2] sm:$0xff]
          %v467 = vmul.f32 %v466, 0.25
          %v468 = vmul.f32 %v467, %v467
          %v469 = vsub.f32 0.0, %v468
          %v470 = vmul.f32 %v469, 2.0
          %v471 = vmul.f32 %v470, 1.442695
          %v472 = vpow.pop %v471
          %v473 = vld [vmem:[#allocation8] sm:$0xff]
          %v474 = vld [vmem:[#allocation9] sm:$0xff]
          %475 = vmatprep.subr.mxu0 0.0
          %476 = vmatpush1.xpose.msra.mxu0 0.0
          %477 = vmatprep.subr.mxu0 0.0
          %478 = vmatpush1.xpose.msra.mxu0 0.0
          %479 = vmatprep.subr.mxu0 0.0
          %480 = vmatpush1.xpose.msra.mxu0 0.0
          %481 = vmatprep.subr.mxu0 0.0
          %482 = vmatpush1.xpose.msra.mxu0 0.0
          %483 = vmatprep.subr.mxu0 0.0
          %484 = vmatpush1.xpose.msra.mxu0 0.0
          %485 = vmatprep.subr.mxu0 0.0
          %486 = vmatpush1.xpose.msra.mxu0 0.0
          %487 = vmatprep.subr.mxu0 0.0
          %488 = vmatpush1.xpose.msra.mxu0 0.0
          %489 = vmatprep.subr.mxu0 0.0
          %490 = vmatpush1.xpose.msra.mxu0 0.0
          %491 = vmatprep.subr.mxu0 0.0
          %492 = vmatpush1.xpose.msra.mxu0 0.0
          %493 = vmatprep.subr.mxu0 0.0
          %494 = vmatpush1.xpose.msra.mxu0 0.0
          %495 = vmatprep.subr.mxu0 0.0
          %496 = vmatpush1.xpose.msra.mxu0 0.0
          %497 = vmatprep.subr.mxu0 0.0
          %498 = vmatpush1.xpose.msra.mxu0 0.0
          %499 = vmatprep.subr.mxu0 0.0
          %500 = vmatpush1.xpose.msra.mxu0 0.0
          %501 = vmatprep.subr.mxu0 0.0
          %502 = vmatpush1.xpose.msra.mxu0 0.0
          %503 = vmatprep.subr.mxu0 0.0
          %504 = vmatpush1.xpose.msra.mxu0 0.0
          %505 = vmatprep.subr.mxu0 0.0
          %506 = vmatpush1.xpose.msra.mxu0 %v474
          %507 = vmatprep.subr.mxu0 0.0
          %508 = vmatpush2.xpose.msra.mxu0 0.0
          %509 = vmatprep.subr.mxu0 0.0
          %510 = vmatpush2.xpose.msra.mxu0 0.0
          %511 = vmatprep.subr.mxu0 0.0
          %512 = vmatpush2.xpose.msra.mxu0 0.0
          %513 = vmatprep.subr.mxu0 0.0
          %514 = vmatpush2.xpose.msra.mxu0 0.0
          %515 = vmatprep.subr.mxu0 0.0
          %516 = vmatpush2.xpose.msra.mxu0 0.0
          %517 = vmatprep.subr.mxu0 0.0
          %518 = vmatpush2.xpose.msra.mxu0 0.0
          %519 = vmatprep.subr.mxu0 0.0
          %520 = vmatpush2.xpose.msra.mxu0 0.0
          %521 = vmatprep.subr.mxu0 0.0
          %522 = vmatpush2.xpose.msra.mxu0 0.0
          %523 = vmatprep.subr.mxu0 0.0
          %524 = vmatpush2.xpose.msra.mxu0 0.0
          %525 = vmatprep.subr.mxu0 0.0
          %526 = vmatpush2.xpose.msra.mxu0 0.0
          %527 = vmatprep.subr.mxu0 0.0
          %528 = vmatpush2.xpose.msra.mxu0 0.0
          %529 = vmatprep.subr.mxu0 0.0
          %530 = vmatpush2.xpose.msra.mxu0 0.0
          %531 = vmatprep.subr.mxu0 0.0
          %532 = vmatpush2.xpose.msra.mxu0 0.0
          %533 = vmatprep.subr.mxu0 0.0
          %534 = vmatpush2.xpose.msra.mxu0 0.0
          %535 = vmatprep.subr.mxu0 0.0
          %536 = vmatpush2.xpose.msra.mxu0 0.0
          %537 = vmatprep.subr.mxu0 0.0
          %538 = vmatpush2.xpose.msra.mxu0 0.0
          %539 = vmatprep.mubr.f32.mxu0 0.0
          %540 = vmatmul.mubr.f32.gmra.mxu0 %v473
          %v541 = vpop.f32.mrf.mxu0
          %v542 = vadd.f32 0.0, %v541
          %v543 = vpop.f32.mrf.mxu0
          %544 = vdwg.mxu0
          %v545 = vmul.f32 %v473, %v473
          %546 = vadd.xlane.f32.xlu0 %v545
          %v547 = vpop.xlane.xlu0 %546
          %v548 = vmul.f32 %v474, %v474
          %549 = vmatprep.subr.mxu0 0.0
          %550 = vmatpush1.xpose.msra.mxu0 0.0
          %551 = vmatprep.subr.mxu0 0.0
          %552 = vmatpush1.xpose.msra.mxu0 0.0
          %553 = vmatprep.subr.mxu0 0.0
          %554 = vmatpush1.xpose.msra.mxu0 0.0
          %555 = vmatprep.subr.mxu0 0.0
          %556 = vmatpush1.xpose.msra.mxu0 0.0
          %557 = vmatprep.subr.mxu0 0.0
          %558 = vmatpush1.xpose.msra.mxu0 0.0
          %559 = vmatprep.subr.mxu0 0.0
          %560 = vmatpush1.xpose.msra.mxu0 0.0
          %561 = vmatprep.subr.mxu0 0.0
          %562 = vmatpush1.xpose.msra.mxu0 0.0
          %563 = vmatprep.subr.mxu0 0.0
          %564 = vmatpush1.xpose.msra.mxu0 0.0
          %565 = vmatprep.subr.mxu0 0.0
          %566 = vmatpush1.xpose.msra.mxu0 0.0
          %567 = vmatprep.subr.mxu0 0.0
          %568 = vmatpush1.xpose.msra.mxu0 0.0
          %569 = vmatprep.subr.mxu0 0.0
          %570 = vmatpush1.xpose.msra.mxu0 0.0
          %571 = vmatprep.subr.mxu0 0.0
          %572 = vmatpush1.xpose.msra.mxu0 0.0
          %573 = vmatprep.subr.mxu0 0.0
          %574 = vmatpush1.xpose.msra.mxu0 0.0
          %575 = vmatprep.subr.mxu0 0.0
          %576 = vmatpush1.xpose.msra.mxu0 0.0
          %577 = vmatprep.subr.mxu0 0.0
          %578 = vmatpush1.xpose.msra.mxu0 0.0
          %579 = vmatprep.subr.mxu0 0.0
          %580 = vmatpush1.xpose.msra.mxu0 %v548
          %581 = vmatprep.subr.mxu0 0.0
          %582 = vmatpush2.xpose.msra.mxu0 0.0
          %583 = vmatprep.subr.mxu0 0.0
          %584 = vmatpush2.xpose.msra.mxu0 0.0
          %585 = vmatprep.subr.mxu0 0.0
          %586 = vmatpush2.xpose.msra.mxu0 0.0
          %587 = vmatprep.subr.mxu0 0.0
          %588 = vmatpush2.xpose.msra.mxu0 0.0
          %589 = vmatprep.subr.mxu0 0.0
          %590 = vmatpush2.xpose.msra.mxu0 0.0
          %591 = vmatprep.subr.mxu0 0.0
          %592 = vmatpush2.xpose.msra.mxu0 0.0
          %593 = vmatprep.subr.mxu0 0.0
          %594 = vmatpush2.xpose.msra.mxu0 0.0
          %595 = vmatprep.subr.mxu0 0.0
          %596 = vmatpush2.xpose.msra.mxu0 0.0
          %597 = vmatprep.subr.mxu0 0.0
          %598 = vmatpush2.xpose.msra.mxu0 0.0
          %599 = vmatprep.subr.mxu0 0.0
          %600 = vmatpush2.xpose.msra.mxu0 0.0
          %601 = vmatprep.subr.mxu0 0.0
          %602 = vmatpush2.xpose.msra.mxu0 0.0
          %603 = vmatprep.subr.mxu0 0.0
          %604 = vmatpush2.xpose.msra.mxu0 0.0
          %605 = vmatprep.subr.mxu0 0.0
          %606 = vmatpush2.xpose.msra.mxu0 0.0
          %607 = vmatprep.subr.mxu0 0.0
          %608 = vmatpush2.xpose.msra.mxu0 0.0
          %609 = vmatprep.subr.mxu0 0.0
          %610 = vmatpush2.xpose.msra.mxu0 0.0
          %611 = vmatprep.subr.mxu0 0.0
          %612 = vmatpush2.xpose.msra.mxu0 0.0
          %613 = vmatprep.mubr.f32.mxu0 0.0
          %614 = vmatmul.mubr.f32.gmra.mxu0 1.0
          %v615 = vpop.f32.mrf.mxu0
          %v616 = vadd.f32 0.0, %v615
          %v617 = vpop.f32.mrf.mxu0
          %618 = vdwg.mxu0
          %v619 = vlaneseq
          %v620 = vshrl.u32 %v619, 7
          %v621 = vsub.s32 0, %v620
          %v622 = vrot.slane %v616, %v621
          %v623 = vadd.f32 %v547, %v622
          %v624 = vmul.f32 %v542, 2.0
          %v625 = vsub.f32 %v623, %v624
          %v626 = vmax.f32 %v625, 0.0
          %v627 = vrsqrt.pop %v626
          %v628 = vmul.f32 %v626, %v627
          %vm629 = vcmp.eq.f32.partialorder %v626, inf
          %v630 = vsel %vm629, %v626, %v628
          %vm631 = vcmp.eq.f32.partialorder %v626, 0.0
          %v632 = vand.u32 %v626, 2147483648
          %v633 = vsel %vm631, %v632, %v630
          %v634 = vsel %vm460, %v633, 0.0
          %635 = vadd.xlane.f32.xlu0 %v634
          %v636 = vpop.xlane.xlu0 %635
          %v637 = vmul.f32 %v636, 0.125
          %v638 = vrcp.pop %v637
          %vm639 = vcmp.gt.f32.partialorder %v637, 0.0
          %v640 = vmul.f32 %v633, %v638
          %v641 = vsel %vm639, 1, 0
          %vm642 = vcmp.eq.s32.totalorder %v641, 1
          %v643 = vsel %vm642, %v640, 0.0
          %v644 = vmul.f32 %v638, %v638
          %v645 = vmul.f32 %v626, %v644
          %v646 = vsel %vm642, %v645, 0.0
          %v647 = vsub.f32 1.0, %v643
          %v648 = vmax.f32 %v647, 0.0
          %v649 = vmul.f32 %v472, %v646
          %v650 = vsub.f32 1.0, %v472
          %v651 = vmul.f32 %v648, %v648
          %v652 = vmul.f32 %v650, %v651
          %v653 = vadd.f32 %v649, %v652
          %v654 = vsel %vm460, %v653, 0.0
          %655 = vadd.xlane.f32.xlu0 %v654
          %v656 = vpop.xlane.xlu0 %655
          %v657 = vrot.slane %v656, 4
          %v658 = vadd.f32 %v656, %v657
          %v659 = vrot.slane %v658, 2
          %v660 = vadd.f32 %v658, %v659
          %v661 = vrot.slane %v660, 1
          %v662 = vadd.f32 %v660, %v661
          %s663 = vtos %v662
          %v664 = vstv %s663
          %665 = vst [vmem:[#allocation11] sm:$0xff] %v664
        $region60: #{tpu_custom_call.1} parent=35 // pred_fallthru
          _
        // Predicated region
        $region61: #{tpu_custom_call.1} parent=35 // pred_check
          %p666 = pneg %p154
        $region62: #{tpu_custom_call.1} parent=35 // pred_check_branch
          %668 = sbr.rel (%p666) target = $region64
        $region63: #{tpu_custom_call.1} parent=35 // pred_region
          %s670 = ssub.s32 128, 128
          %671 = vsyncadd [#allocation5], %s670
          %s672 = smul.addr %s27, 128
          %s673 = scalar_lea.hbm %s4, %s672
          %s675 = sshll.u32 [#allocation11], 4
          %s676 = int_to_ptr.vmem [resolvable:$true] %s675
          %678 = dma.vmem_to_hbm [thread:$0]  %s676, 128, %s673, [#allocation5]
        $region64: #{tpu_custom_call.1} parent=35 // pred_fallthru
          _
        // Predicated region
        $region65: #{tpu_custom_call.1} parent=35 // pred_check
          %p679 = pneg %p154
        $region66: #{tpu_custom_call.1} parent=35 // pred_check_branch
          %681 = sbr.rel (%p679) target = $region68
        $region67: #{tpu_custom_call.1} parent=35 // pred_region
          %682 = dma.done [#allocation5], 128
        $region68: #{tpu_custom_call.1} parent=35 // pred_fallthru
          _
      $region36: #{tpu_custom_call.1} parent=5 // pred_fallthru
        _
      %p683 = scmp.le.s32.totalorder 2, %s18
      // Predicated region
      $region69: #{tpu_custom_call.1} parent=5 // pred_check
        %p684 = pneg %p683
      $region70: #{tpu_custom_call.1} parent=5 // pred_check_branch
        %686 = sbr.rel (%p684) target = $region72
      $region71: #{tpu_custom_call.1} parent=5 // pred_region
        %s687 = ssub.s32 %s18, 2
      $region72: #{tpu_custom_call.1} parent=5 // pred_fallthru
        _
    $region6: #{tpu_custom_call.1} parent=1 // loop_footer
      %s22 = sadd.s32 1, %s18
    $region7: #{tpu_custom_call.1} parent=1 // loop_footer_branch
      %17 = sbr.rel target = $region3
    $region8: #{tpu_custom_call.1} parent=1 // loop_exit
      _
    %688 = vsyncpa [#allocation4], 1
    %s689 = scalar_lea.sflag [#allocation4], 1
    %690 = vsyncpa %s689, 1
    %691 = vsyncpa [#allocation7], 1
    %s692 = scalar_lea.sflag [#allocation7], 1
    %693 = vsyncpa %s692, 1
    %694 = vsyncpa [#allocation10], 1
    %695 = vsyncpa [#allocation5], 1
    %s696 = scalar_lea.sflag [#allocation5], 1
    %697 = vsyncpa %s696, 1

</llo_original>
